<compile_context>
chip_gen: v5e
topology: v5e:2x2
jax: 0.10.0
libtpu: 0.0.40
codegen_flags: <defaults>
</compile_context>

<pallas_src>
import functools

import jax
import jax.numpy as jnp
from jax.experimental import pallas as pl
from jax.experimental.pallas import tpu as pltpu


# ----------------------------- Pallas kernels ------------------------------
# Layout: activations (C, M); conv weights (Cout, K) with K = 9*Cin (taps ky-major, then
# kx, then cin); im2col patches (K, M); per-K-row BN scale/bias (K, 1) in f32.

def _gemm_kernel(w_ref, p_ref, o_ref):
    # Stem conv: no BN on the raw input image.
    o_ref[...] = jnp.dot(w_ref[...], p_ref[...],
                         preferred_element_type=jnp.float32).astype(o_ref.dtype)


def _gemm_bn_kernel(w_ref, p_ref, s_ref, b_ref, o_ref):
    # Fused pre-conv BN+ReLU on the patch tile (f32 VPU math), bf16 MXU dot.
    a = jnp.maximum(p_ref[...].astype(jnp.float32) * s_ref[...] + b_ref[...], 0.0)
    a = a.astype(jnp.bfloat16)
    o_ref[...] = jnp.dot(w_ref[...], a,
                         preferred_element_type=jnp.float32).astype(o_ref.dtype)


def _gemm_bn_res_kernel(w_ref, p_ref, s_ref, b_ref, r_ref, o_ref):
    # conv2 of a basic block: fused BN+ReLU on patches + residual add in the epilogue.
    a = jnp.maximum(p_ref[...].astype(jnp.float32) * s_ref[...] + b_ref[...], 0.0)
    a = a.astype(jnp.bfloat16)
    acc = jnp.dot(w_ref[...], a, preferred_element_type=jnp.float32)
    o_ref[...] = (acc + r_ref[...].astype(jnp.float32)).astype(o_ref.dtype)


def _gemm_bn_sc_kernel(cin, w_ref, wsc_ref, p_ref, s_ref, b_ref, o_ref, osc_ref):
    # conv1 of a downsample block: main 3x3 GEMM plus the 1x1 stride-2 shortcut GEMM,
    # taken from the centre tap (rows 4*cin:5*cin) of the already BN'd patch tile.
    a = jnp.maximum(p_ref[...].astype(jnp.float32) * s_ref[...] + b_ref[...], 0.0)
    a = a.astype(jnp.bfloat16)
    o_ref[...] = jnp.dot(w_ref[...], a,
                         preferred_element_type=jnp.float32).astype(o_ref.dtype)
    a_c = a[4 * cin:5 * cin, :]
    osc_ref[...] = jnp.dot(wsc_ref[...], a_c,
                           preferred_element_type=jnp.float32).astype(osc_ref.dtype)


def _tail_kernel(x_ref, s_ref, b_ref, pool_ref, w_ref, bias_ref, o_ref):
    # Fused bn_final + ReLU + global average pool (as a matmul) + fc.  Output is (nc, N).
    h = jnp.maximum(x_ref[...].astype(jnp.float32) * s_ref[...] + b_ref[...], 0.0)
    pooled = jnp.dot(h, pool_ref[...], preferred_element_type=jnp.float32)     # (C, N)
    o_ref[...] = jnp.dot(w_ref[...], pooled,
                         preferred_element_type=jnp.float32) + bias_ref[...]


# ----------------------------- kernel wrappers ------------------------------

def conv_gemm(w, patches, scale=None, bias=None, residual=None, w_sc=None,
              out_dtype=jnp.bfloat16):
    """w: (Cout, K) bf16; patches: (K, M) bf16.  Returns (Cout, M) [and shortcut]."""
    cout, K = w.shape
    _, M = patches.shape
    steps = 2 if (M >= 256 and M % 256 == 0) else 1   # >=2 lane-tiles so v7x uses both TCs
    tm = M // steps                                   # 1024 / 256 / 128 -> all % 128 == 0
    w_spec = pl.BlockSpec((cout, K), lambda i: (0, 0))
    p_spec = pl.BlockSpec((K, tm), lambda i: (0, i))
    o_spec = pl.BlockSpec((cout, tm), lambda i: (0, i))
    v_spec = pl.BlockSpec((K, 1), lambda i: (0, 0))
    cp = pltpu.CompilerParams(dimension_semantics=("parallel",))

    if scale is None:
        return pl.pallas_call(
            _gemm_kernel,
            out_shape=jax.ShapeDtypeStruct((cout, M), out_dtype),
            grid=(steps,), in_specs=[w_spec, p_spec], out_specs=o_spec,
            compiler_params=cp)(w, patches)

    if w_sc is not None:
        cin = w_sc.shape[1]
        sc_spec = pl.BlockSpec((cout, cin), lambda i: (0, 0))
        return pl.pallas_call(
            functools.partial(_gemm_bn_sc_kernel, cin),
            out_shape=(jax.ShapeDtypeStruct((cout, M), out_dtype),
                       jax.ShapeDtypeStruct((cout, M), out_dtype)),
            grid=(steps,),
            in_specs=[w_spec, sc_spec, p_spec, v_spec, v_spec],
            out_specs=(o_spec, o_spec),
            compiler_params=cp)(w, w_sc, patches, scale, bias)

    if residual is not None:
        return pl.pallas_call(
            _gemm_bn_res_kernel,
            out_shape=jax.ShapeDtypeStruct((cout, M), out_dtype),
            grid=(steps,),
            in_specs=[w_spec, p_spec, v_spec, v_spec, o_spec],
            out_specs=o_spec, compiler_params=cp)(w, patches, scale, bias, residual)

    return pl.pallas_call(
        _gemm_bn_kernel,
        out_shape=jax.ShapeDtypeStruct((cout, M), out_dtype),
        grid=(steps,),
        in_specs=[w_spec, p_spec, v_spec, v_spec],
        out_specs=o_spec, compiler_params=cp)(w, patches, scale, bias)


def tail_fc(x2d, scale, bias, fc_w, fc_b, N, HW):
    """x2d: (C, N*HW) bf16; scale/bias: (C,1) f32; fc_w: (nc, C); fc_b: (nc, 1)."""
    C, M = x2d.shape
    nc = fc_w.shape[0]
    # Global average pooling expressed as a (M, N) matmul so everything stays 2-D.
    pool = jnp.kron(jnp.eye(N, dtype=jnp.float32),
                    jnp.ones((HW, 1), jnp.float32)) / float(HW)
    out = pl.pallas_call(
        _tail_kernel,
        out_shape=jax.ShapeDtypeStruct((nc, N), jnp.float32),
        grid=(1,),
        in_specs=[pl.BlockSpec((C, M), lambda i: (0, 0)),
                  pl.BlockSpec((C, 1), lambda i: (0, 0)),
                  pl.BlockSpec((C, 1), lambda i: (0, 0)),
                  pl.BlockSpec((M, N), lambda i: (0, 0)),
                  pl.BlockSpec((nc, C), lambda i: (0, 0)),
                  pl.BlockSpec((nc, 1), lambda i: (0, 0))],
        out_specs=pl.BlockSpec((nc, N), lambda i: (0, 0)),
    )(x2d, scale, bias, pool, fc_w, fc_b)
    return out.T                                                       # (N, nc)


# ----------------------------- im2col glue (plain JAX) ------------------------------

def _im2col_cf(x4, ksize, stride, pad, pad_value=None):
    """x4: (C, N, H, W) channel-major.  Returns ((K, M) patches, (N, Ho, Wo)).

    K = ksize*ksize*C with taps ky-major, then kx, then channel (matches the (Cout, K)
    weight layout).  `pad_value` is a per-channel border fill such that the in-kernel
    fused BN+ReLU maps padded positions to exactly 0 (it is 0 for the eval-mode fold
    used here, since beta=0)."""
    C, N, H, W = x4.shape
    Ho = (H + 2 * pad - ksize) // stride + 1
    Wo = (W + 2 * pad - ksize) // stride + 1
    xp = x4
    if pad > 0:
        xp = jnp.pad(x4, ((0, 0), (0, 0), (pad, pad), (pad, pad)))
        if pad_value is not None:
            interior = jnp.pad(jnp.ones((1, 1, H, W), jnp.float32),
                               ((0, 0), (0, 0), (pad, pad), (pad, pad)))
            border = (1.0 - interior) * pad_value.reshape(C, 1, 1, 1)
            xp = xp + border.astype(xp.dtype)
    taps = []
    for ky in range(ksize):
        for kx in range(ksize):
            taps.append(xp[:, :, ky:ky + stride * Ho:stride, kx:kx + stride * Wo:stride])
    patches = jnp.concatenate(taps, axis=0)                 # (K, N, Ho, Wo)
    return patches.reshape(ksize * ksize * C, N * Ho * Wo), (N, Ho, Wo)


# ----------------------------- parameters ------------------------------

def _kaiming_conv(key, kh, kw, cin, cout):
    # kaiming_normal_(mode='fan_out', nonlinearity='relu'): std = sqrt(2 / (kh*kw*cout))
    std = (2.0 / (kh * kw * cout)) ** 0.5
    w = std * jax.random.normal(key, (cout, kh, kw, cin), jnp.float32)
    return w.reshape(cout, kh * kw * cin).astype(jnp.bfloat16)   # K index = tap*cin + c


def _bn_fold(c, reps, eps=1e-5):
    # Eval-mode fold of the module-init BN (weight=1, bias=0, running mean=0, var=1).
    gamma = jnp.ones((c,), jnp.float32)
    beta = jnp.zeros((c,), jnp.float32)
    mean = jnp.zeros((c,), jnp.float32)
    var = jnp.ones((c,), jnp.float32)
    scale = gamma / jnp.sqrt(var + eps)
    bias = beta - mean * scale
    pad_val = -bias / scale          # conv-border fill that fused BN+ReLU maps to 0
    scale_k = jnp.tile(scale, reps).reshape(reps * c, 1)
    bias_k = jnp.tile(bias, reps).reshape(reps * c, 1)
    return scale_k, bias_k, pad_val


def init_wideresnet(key, depth=10, num_classes=10, widen_factor=1):
    nch = [16, 16 * widen_factor, 32 * widen_factor, 64 * widen_factor]
    assert (depth - 4) % 6 == 0
    n = (depth - 4) // 6
    keys = jax.random.split(key, 64)
    ki = iter(range(64))

    params = {"conv1": _kaiming_conv(keys[next(ki)], 3, 3, 3, nch[0])}
    blocks = []
    strides = [1, 2, 2]
    for bidx in range(3):
        in_planes, out_planes, stride = nch[bidx], nch[bidx + 1], strides[bidx]
        layer = []
        for j in range(n):
            cin = in_planes if j == 0 else out_planes
            s = stride if j == 0 else 1
            bp = {
                "cin": cin, "cout": out_planes, "stride": s,
                "bn1": _bn_fold(cin, 9),
                "conv1": _kaiming_conv(keys[next(ki)], 3, 3, cin, out_planes),
                "bn2": _bn_fold(out_planes, 9),
                "conv2": _kaiming_conv(keys[next(ki)], 3, 3, out_planes, out_planes),
            }
            if cin != out_planes:
                bp["conv_sc"] = _kaiming_conv(keys[next(ki)], 1, 1, cin, out_planes)
            layer.append(bp)
        blocks.append(layer)
    params["blocks"] = blocks
    sc, bi, _ = _bn_fold(nch[3], 1)
    params["bn_final"] = (sc, bi)                       # (C, 1) each
    bound = 1.0 / (nch[3] ** 0.5)
    params["fc_w"] = jax.random.uniform(keys[next(ki)], (num_classes, nch[3]),
                                        jnp.float32, -bound, bound)
    params["fc_b"] = jnp.zeros((num_classes, 1), jnp.float32)
    params["nChannels"] = nch[3]
    return params


# ----------------------------- forward pass ------------------------------

def basic_block_forward(act, spatial, bp):
    # act: (Cin, N*H*W) bf16, channel-major
    N, H, W = spatial
    cin, cout, s = bp["cin"], bp["cout"], bp["stride"]
    scale1, bias1, pad1 = bp["bn1"]
    x4 = act.reshape(cin, N, H, W)
    p1, (N, Ho, Wo) = _im2col_cf(x4, 3, s, 1, pad_value=pad1)
    if "conv_sc" in bp:
        # conv1 + 1x1 stride-s shortcut of relu(bn1(x)) in a single pallas_call
        out1, residual = conv_gemm(bp["conv1"], p1, scale1, bias1, w_sc=bp["conv_sc"])
    else:
        out1 = conv_gemm(bp["conv1"], p1, scale1, bias1)
        residual = act                                  # identity shortcut (raw x)
    scale2, bias2, pad2 = bp["bn2"]
    p2, _ = _im2col_cf(out1.reshape(cout, N, Ho, Wo), 3, 1, 1, pad_value=pad2)
    # conv2 with bn2+relu fused on its patches and the residual add fused in the epilogue
    out = conv_gemm(bp["conv2"], p2, scale2, bias2, residual=residual)
    return out, (N, Ho, Wo)


def wideresnet_forward(params, x_nchw):
    N = x_nchw.shape[0]
    x_cf = jnp.transpose(x_nchw, (1, 0, 2, 3)).astype(jnp.bfloat16)    # (C, N, H, W)
    p0, spatial = _im2col_cf(x_cf, 3, 1, 1)                            # zero-pad raw image
    act = conv_gemm(params["conv1"], p0)                               # (16, N*32*32)
    for layer in params["blocks"]:
        for bp in layer:
            act, spatial = basic_block_forward(act, spatial, bp)
    _, H, W = spatial
    scale, bias = params["bn_final"]
    # F.avg_pool2d(out, 8) on the final 8x8 map == global mean, then view + fc (fused)
    return tail_fc(act, scale, bias, params["fc_w"], params["fc_b"], N, H * W)


# ----------------------------- main ------------------------------

if __name__ == "__main__":
    key = jax.random.PRNGKey(0)
    pkey, xkey = jax.random.split(key)
    params = init_wideresnet(pkey, depth=10, num_classes=10, widen_factor=1)

    # 32x32 spatial is the smallest input consistent with avg_pool2d(kernel=8) after the
    # two stride-2 stages (32 -> 16 -> 8).
    x = jax.random.normal(xkey, (2, 3, 32, 32), jnp.float32)   # NCHW like PyTorch

    logits = wideresnet_forward(params, x)
    logits = jax.block_until_ready(logits)
    assert logits.shape == (2, 10) and logits.dtype == jnp.float32
    print("KERNEL_OK")
</pallas_src>

<mosaic_0001>
module attributes {stable_mosaic.version = 11 : i64} {
  func.func @_gemm_kernel(%arg0: i32, %arg1: memref<16x27xbf16, #tpu.memory_space<vmem>>, %arg2: memref<27x1024xbf16, #tpu.memory_space<vmem>>, %arg3: memref<16x1024xbf16, #tpu.memory_space<vmem>>) attributes {dimension_semantics = [#tpu.dimension_semantics<parallel>], iteration_bounds = array<i64: 2>, scalar_prefetch = 0 : i64, scratch_operands = 0 : i64, tpu.core_type = #tpu.core_type<tc>, window_params = [{pipeline_mode = #tpu.pipeline_mode<synchronous>, transform_indices = @transform_0, window_bounds = array<i64: 16, 27>}, {transform_indices = @transform_1, window_bounds = array<i64: 27, 1024>}, {transform_indices = @transform_2, window_bounds = array<i64: 16, 1024>}]} {
    %c0 = arith.constant 0 : index
    %c0_0 = arith.constant 0 : index
    %0 = vector.load %arg1[%c0, %c0_0] : memref<16x27xbf16, #tpu.memory_space<vmem>>, vector<16x27xbf16>
    %c0_1 = arith.constant 0 : index
    %c0_2 = arith.constant 0 : index
    %1 = vector.load %arg2[%c0_1, %c0_2] : memref<27x1024xbf16, #tpu.memory_space<vmem>>, vector<27x1024xbf16>
    %cst = arith.constant dense<0.000000e+00> : vector<16x1024xf32>
    %2 = tpu.matmul %0, %1, %cst {dimension_numbers = #tpu.dot_dimension_numbers<[1], [0], [0], [1], [0, 0, 1, 1], [], []>} : vector<16x27xbf16>, vector<27x1024xbf16>, vector<16x1024xf32> -> vector<16x1024xf32>
    %3 = arith.truncf %2 : vector<16x1024xf32> to vector<16x1024xbf16>
    %c0_3 = arith.constant 0 : index
    %c0_4 = arith.constant 0 : index
    %4 = vector.load %arg3[%c0_3, %c0_4] : memref<16x1024xbf16, #tpu.memory_space<vmem>>, vector<16x1024xbf16>
    tpu.vector_store %arg3[%c0_3, %c0_4], %3 {strides = array<i32>} : memref<16x1024xbf16, #tpu.memory_space<vmem>>, vector<16x1024xbf16>,
    return
  }
  func.func @transform_0(%arg0: i32) -> (i32, i32) {
    %c0_i32 = arith.constant 0 : i32
    %c0_i32_0 = arith.constant 0 : i32
    %c0_i32_1 = arith.constant 0 : i32
    return %c0_i32, %c0_i32_0 : i32, i32
  }
  func.func @transform_1(%arg0: i32) -> (i32, i32) {
    %c0_i32 = arith.constant 0 : i32
    %c0_i32_0 = arith.constant 0 : i32
    return %c0_i32, %arg0 : i32, i32
  }
  func.func @transform_2(%arg0: i32) -> (i32, i32) {
    %c0_i32 = arith.constant 0 : i32
    %c0_i32_0 = arith.constant 0 : i32
    return %c0_i32, %arg0 : i32, i32
  }
}

</mosaic_0001>

<llo_original>
// kernel: tpu_custom_call.1
$region0: #{tpu_custom_call.1}
  #allocation0 [shape = 'u32[]', space=smem, size = 0x4, offset = 0x4, fixed_abs, tag = 'smem constant byte address 0x4 - core index']
  #allocation1 [shape = 'u32[72,128]{1,0:T(1,128)}', space=vmem, size = 0x9000, scoped, tag = 'internal scratch']
  %s0 = inlined_call_operand.hbm [shape: bf16[16,27], index: 0, kind: input, shape index: {}]
  %s1 = inlined_call_operand.hbm [shape: bf16[27,2048], index: 1, kind: input, shape index: {}]
  %s2 = inlined_call_operand.hbm [shape: bf16[16,2048], index: 2, kind: output, shape index: {}]
  %s3 = sld [smem:[#allocation0]]
  $region49: #{tpu_custom_call.1} parent=0
    _
  %s5 = ssub.s32 1, %s3
  %s6 = scalar_select 0, %s5, %s3
  $region1: #{tpu_custom_call.1} parent=0
    #allocation2 [shape = 'u8[4096]{0}', space=vmem, size = 0x1000, scoped, tag = 'input window, operand 0, single buffered']
    #allocation3 [shape = 's32[2]{0}', space=sflag, size = 0x8, scoped, tag = 'scoped memory for tpu_custom_call.1']
    #allocation4 [shape = 's32[2]{0}', space=sflag, size = 0x8, scoped, tag = 'scoped memory for tpu_custom_call.1']
    #allocation5 [shape = 'u8[131072]{0}', space=vmem, size = 0x20000, scoped, tag = 'input window, operand 1']
    #allocation6 [shape = 's32[2]{0}', space=sflag, size = 0x8, scoped, tag = 'scoped memory for tpu_custom_call.1']
    #allocation7 [shape = 'u8[65536]{0}', space=vmem, size = 0x10000, scoped, tag = 'output window, operand 0']
    %7 = vsyncpa [#allocation3], 0
    %8 = vsyncpa [#allocation6], 0
    %s9 = scalar_lea.sflag [#allocation6], 1
    %10 = vsyncpa %s9, 0
    %11 = vsyncpa [#allocation4], 0
    %s12 = scalar_lea.sflag [#allocation4], 1
    %13 = vsyncpa %s12, 0
    loop: start=0, step=1, limit=4
    $region2: #{tpu_custom_call.1} parent=1 // loop_pre_header
      _
    $region3: #{tpu_custom_call.1} parent=1 // loop_header
      %s15 = sphi 0, %s19
      %p16 = scmp.ge.s32.totalorder %s15, 4
      %s23 = sphi 0, %s23
      %s25 = sphi 0, %s23
      %s26 = sphi 0, %s25
      %s40 = sphi 0, %s26
      %s46 = sphi 0, %s48
      %s49 = sphi 0, %s46
      %s50 = sphi 0, %s49
      %s66 = sphi 0, %s50
      %s72 = sphi 0, %s74
      %s75 = sphi 0, %s72
      %s76 = sphi 0, %s75
      %s92 = sphi 0, %s76
    $region4: #{tpu_custom_call.1} parent=1 // loop_header_branch
      %18 = sbr.rel (%p16) target = $region8
    $region5: #{tpu_custom_call.1} parent=1 // loop_body
      %s20 = ssub.s32 %s15, 1
      %s21 = ssub.s32 %s15, 2
      %s22 = sadd.s32 %s15, 1
      %s24 = sadd.s32 %s23, 1
      %p27 = scmp.eq.s32.totalorder %s15, 1
      %p28 = scmp.ne.s32.totalorder %s23, %s25
      %p29 = scmp.eq.s32.totalorder %s15, 0
      %p30 = por %p28, %p29
      %p31 = scmp.ne.s32.totalorder %s23, %s25
      %p32 = scmp.eq.s32.totalorder %s20, 1
      %p33 = por %p31, %p32
      %p34 = scmp.ne.s32.totalorder %s25, %s26
      %p35 = scmp.eq.s32.totalorder %s20, 0
      %p36 = por %p34, %p35
      %p37 = scmp.ne.s32.totalorder %s25, %s26
      %p38 = scmp.eq.s32.totalorder %s21, 1
      %p39 = por %p37, %p38
      %p41 = scmp.ne.s32.totalorder %s26, %s40
      %p42 = scmp.eq.s32.totalorder %s21, 0
      %p43 = por %p41, %p42
      %s44 = ssub.s32 %s15, %s22
      %p45 = scmp.eq.s32.totalorder %s44, 0
      %s47 = sadd.s32 %s46, 1
      %s48 = scalar_select %p45, %s46, %s47
      %p51 = pneg %p45
      %p52 = scmp.eq.s32.totalorder %s15, 1
      %p53 = por %p51, %p52
      %p54 = scmp.ne.s32.totalorder %s46, %s49
      %p55 = scmp.eq.s32.totalorder %s15, 0
      %p56 = por %p54, %p55
      %p57 = scmp.ne.s32.totalorder %s46, %s49
      %p58 = scmp.eq.s32.totalorder %s20, 1
      %p59 = por %p57, %p58
      %p60 = scmp.ne.s32.totalorder %s49, %s50
      %p61 = scmp.eq.s32.totalorder %s20, 0
      %p62 = por %p60, %p61
      %p63 = scmp.ne.s32.totalorder %s49, %s50
      %p64 = scmp.eq.s32.totalorder %s21, 1
      %p65 = por %p63, %p64
      %p67 = scmp.ne.s32.totalorder %s50, %s66
      %p68 = scmp.eq.s32.totalorder %s21, 0
      %p69 = por %p67, %p68
      %s70 = ssub.s32 %s15, %s22
      %p71 = scmp.eq.s32.totalorder %s70, 0
      %s73 = sadd.s32 %s72, 1
      %s74 = scalar_select %p71, %s72, %s73
      %p77 = pneg %p71
      %p78 = scmp.eq.s32.totalorder %s15, 1
      %p79 = por %p77, %p78
      %p80 = scmp.ne.s32.totalorder %s72, %s75
      %p81 = scmp.eq.s32.totalorder %s15, 0
      %p82 = por %p80, %p81
      %p83 = scmp.ne.s32.totalorder %s72, %s75
      %p84 = scmp.eq.s32.totalorder %s20, 1
      %p85 = por %p83, %p84
      %p86 = scmp.ne.s32.totalorder %s75, %s76
      %p87 = scmp.eq.s32.totalorder %s20, 0
      %p88 = por %p86, %p87
      %p89 = scmp.ne.s32.totalorder %s75, %s76
      %p90 = scmp.eq.s32.totalorder %s21, 1
      %p91 = por %p89, %p90
      %p93 = scmp.ne.s32.totalorder %s76, %s92
      %p94 = scmp.eq.s32.totalorder %s21, 0
      %p95 = por %p93, %p94
      %p96 = scmp.le.s32.totalorder 1, %s15
      %p97 = scmp.lt.s32.totalorder %s15, 3
      %p98 = pnand %p96, %p97
      %p99 = pneg %p98
      // Predicated region
      $region9: #{tpu_custom_call.1} parent=5 // pred_check
        _
      $region10: #{tpu_custom_call.1} parent=5 // pred_check_branch
        %101 = sbr.rel (%p98) target = $region12
      $region11: #{tpu_custom_call.1} parent=5 // pred_region
        %s102 = ssub.s32 %s15, 1
        // Predicated region
        $region13: #{tpu_custom_call.1} parent=11 // pred_check
          %p103 = pneg %p36
        $region14: #{tpu_custom_call.1} parent=11 // pred_check_branch
          %105 = sbr.rel (%p103) target = $region16
        $region15: #{tpu_custom_call.1} parent=11 // pred_region
          %107 = vsyncadd [#allocation3], 0
          %s108 = sshll.u32 %s0, 4
          %s109 = int_to_ptr.hbm [resolvable:$true] %s108
          %s110 = sshll.u32 [#allocation2], 4
          %s111 = int_to_ptr.vmem [resolvable:$true] %s110
          %116 = dma.hbm_to_vmem [thread:$0]  %s109, 128, %s111, [#allocation3], 64, 64, 4
        $region16: #{tpu_custom_call.1} parent=11 // pred_fallthru
          _
      $region12: #{tpu_custom_call.1} parent=5 // pred_fallthru
        _
      %p117 = scmp.lt.s32.totalorder %s15, 2
      // Predicated region
      $region17: #{tpu_custom_call.1} parent=5 // pred_check
        %p118 = pneg %p117
      $region18: #{tpu_custom_call.1} parent=5 // pred_check_branch
        %120 = sbr.rel (%p118) target = $region20
      $region19: #{tpu_custom_call.1} parent=5 // pred_region
        // Predicated region
        $region21: #{tpu_custom_call.1} parent=19 // pred_check
          %p121 = pneg %p56
        $region22: #{tpu_custom_call.1} parent=19 // pred_check_branch
          %123 = sbr.rel (%p121) target = $region24
        $region23: #{tpu_custom_call.1} parent=19 // pred_region
          %s124 = sand.u32 %s46, 1
          %s125 = scalar_lea.sflag [#allocation6], %s124
          %s126 = sand.u32 %s46, 1
          %s127 = smul.addr %s126, 128
          %s128 = scalar_lea.vmem [#allocation5], %s127
          %s129 = smul.u32 8, %s15
          %131 = vsyncadd %s125, 0
          %s132 = smul.addr %s129, 4
          %s133 = scalar_lea.hbm %s1, %s132
          %s134 = sshll.u32 %s133, 4
          %s135 = int_to_ptr.hbm [resolvable:$true] %s134
          %s136 = sshll.u32 %s128, 4
          %s137 = int_to_ptr.vmem [resolvable:$true] %s136
          %142 = dma.hbm_to_vmem [thread:$0]  %s135, 2048, %s137, %s125, 1024, 512, 32
        $region24: #{tpu_custom_call.1} parent=19 // pred_fallthru
          _
      $region20: #{tpu_custom_call.1} parent=5 // pred_fallthru
        _
      %p143 = scmp.le.s32.totalorder 1, %s15
      %p144 = scmp.lt.s32.totalorder %s15, 3
      %p145 = pnand %p143, %p144
      %p146 = pneg %p145
      // Predicated region
      $region25: #{tpu_custom_call.1} parent=5 // pred_check
        _
      $region26: #{tpu_custom_call.1} parent=5 // pred_check_branch
        %148 = sbr.rel (%p145) target = $region28
      $region27: #{tpu_custom_call.1} parent=5 // pred_region
        %s149 = ssub.s32 %s15, 1
        // Predicated region
        $region29: #{tpu_custom_call.1} parent=27 // pred_check
          %p150 = pneg %p36
        $region30: #{tpu_custom_call.1} parent=27 // pred_check_branch
          %152 = sbr.rel (%p150) target = $region32
        $region31: #{tpu_custom_call.1} parent=27 // pred_region
          %154 = dma.done [#allocation3], 128
        $region32: #{tpu_custom_call.1} parent=27 // pred_fallthru
          _
        %s155 = sand.u32 %s49, 1
        %s156 = scalar_lea.sflag [#allocation6], %s155
        %s157 = sand.u32 %s49, 1
        %s158 = smul.addr %s157, 128
        %s159 = scalar_lea.vmem [#allocation5], %s158
        // Predicated region
        $region33: #{tpu_custom_call.1} parent=27 // pred_check
          %p160 = pneg %p62
        $region34: #{tpu_custom_call.1} parent=27 // pred_check_branch
          %162 = sbr.rel (%p160) target = $region36
        $region35: #{tpu_custom_call.1} parent=27 // pred_region
          %164 = dma.done %s156, 2048
        $region36: #{tpu_custom_call.1} parent=27 // pred_fallthru
          _
        %p165 = pneg %p36
        %p166 = pneg %p33
        %s167 = sand.u32 %s49, 1
        %s168 = scalar_lea.sflag [#allocation6], %s167
        %s169 = sand.u32 %s49, 1
        %s170 = smul.addr %s169, 128
        %s171 = scalar_lea.vmem [#allocation5], %s170
        %p172 = pneg %p62
        %p173 = pneg %p59
        %p174 = pneg %p88
        %p175 = pneg %p85
        %s176 = sand.u32 %s75, 1
        %s177 = scalar_lea.sflag [#allocation4], %s176
        %s178 = sand.u32 %s75, 1
        %s179 = smul.addr %s178, 64
        %s180 = scalar_lea.vmem [#allocation7], %s179
        %s181 = smul.u32 8, %s20
        %s182 = smul.u32 8, %s20
        %v184 = vld [vmem:[#allocation2] sm:$0xf]
        %v185 = vld [vmem:[#allocation2 + $0x4] sm:$0xf]
        %v186 = vld [vmem:[%s159] sm:$0xff]
        %v187 = vld [vmem:[%s159 + $0x8] sm:$0xff]
        %v188 = vld [vmem:[%s159 + $0x10] sm:$0xff]
        %v189 = vld [vmem:[%s159 + $0x18] sm:$0xff]
        %v190 = vld [vmem:[%s159 + $0x20] sm:$0xff]
        %v191 = vld [vmem:[%s159 + $0x28] sm:$0xff]
        %v192 = vld [vmem:[%s159 + $0x30] sm:$0xff]
        %v193 = vld [vmem:[%s159 + $0x38] sm:$0xff]
        %v194 = vld [vmem:[%s159 + $0x40] sm:$0xff]
        %v195 = vld [vmem:[%s159 + $0x48] sm:$0xff]
        %v196 = vld [vmem:[%s159 + $0x50] sm:$0xff]
        %v197 = vld [vmem:[%s159 + $0x58] sm:$0xff]
        %v198 = vld [vmem:[%s159 + $0x60] sm:$0x33]
        %v199 = vld [vmem:[%s159 + $0x68] sm:$0x33]
        %v200 = vld [vmem:[%s159 + $0x70] sm:$0x33]
        %v201 = vld [vmem:[%s159 + $0x78] sm:$0x33]
        %v204 = vunpack.c.l.b16 %v184
        %v205 = vunpack.c.l.b16 %v185
        %v206 = vpack.c.b16 %v205, %v204
        %v223 = vunpack.c.l.b16 %v186
        %v224 = vunpack.c.h.b16 %v186
        %v225 = vunpack.c.l.b16 %v187
        %v226 = vunpack.c.h.b16 %v187
        %v227 = vunpack.c.l.b16 %v188
        %v228 = vunpack.c.h.b16 %v188
        %v229 = vunpack.c.l.b16 %v189
        %v230 = vunpack.c.h.b16 %v189
        %v231 = vunpack.c.l.b16 %v190
        %v232 = vunpack.c.h.b16 %v190
        %v233 = vunpack.c.l.b16 %v191
        %v234 = vunpack.c.h.b16 %v191
        %v235 = vunpack.c.l.b16 %v192
        %v236 = vunpack.c.h.b16 %v192
        %v237 = vunpack.c.l.b16 %v193
        %v238 = vunpack.c.h.b16 %v193
        %v239 = vunpack.c.l.b16 %v194
        %v240 = vunpack.c.h.b16 %v194
        %v241 = vunpack.c.l.b16 %v195
        %v242 = vunpack.c.h.b16 %v195
        %v243 = vunpack.c.l.b16 %v196
        %v244 = vunpack.c.h.b16 %v196
        %v245 = vunpack.c.l.b16 %v197
        %v246 = vunpack.c.h.b16 %v197
        %v247 = vunpack.c.l.b16 %v198
        %v248 = vunpack.c.h.b16 %v198
        %v249 = vunpack.c.l.b16 %v199
        %v250 = vunpack.c.h.b16 %v199
        %v251 = vunpack.c.l.b16 %v200
        %v252 = vunpack.c.h.b16 %v200
        %v253 = vunpack.c.l.b16 %v201
        %v254 = vunpack.c.h.b16 %v201
        %v255 = vpack.c.b16 %v231, %v223
        %v256 = vpack.c.b16 %v232, %v224
        %v257 = vpack.c.b16 %v233, %v225
        %v258 = vpack.c.b16 %v234, %v226
        %v259 = vpack.c.b16 %v235, %v227
        %v260 = vpack.c.b16 %v236, %v228
        %v261 = vpack.c.b16 %v237, %v229
        %v262 = vpack.c.b16 %v238, %v230
        %v263 = vpack.c.b16 %v247, %v239
        %v264 = vpack.c.b16 %v248, %v240
        %v265 = vpack.c.b16 %v249, %v241
        %v266 = vpack.c.b16 %v250, %v242
        %v267 = vpack.c.b16 %v251, %v243
        %v268 = vpack.c.b16 %v252, %v244
        %v269 = vpack.c.b16 %v253, %v245
        %v270 = vpack.c.b16 %v254, %v246
        %vm279 = vcmask 220160
        %v281 = vsel %vm279, %v206, 0
        %vm283 = vcmask 1044480
        %vm284 = vcmask 1045504
        %v285 = vsel %vm283, 4294967295, 65535
        %v286 = vsel %vm284, %v285, 0
        %v288 = vand.u32 %v263, %v286
        %v291 = vand.u32 %v264, %v286
        %v294 = vand.u32 %v265, %v286
        %v297 = vand.u32 %v266, %v286
        %v300 = vand.u32 %v267, %v286
        %v303 = vand.u32 %v268, %v286
        %v306 = vand.u32 %v269, %v286
        %v309 = vand.u32 %v270, %v286
        %311 = vmatpush.bf16.msra.mxu0 0
        %312 = vmatpush.bf16.msra.mxu0 0
        %313 = vmatpush.bf16.msra.mxu0 0
        %314 = vmatpush.bf16.msra.mxu0 0
        %315 = vmatpush.bf16.msra.mxu0 0
        %316 = vmatpush.bf16.msra.mxu0 0
        %317 = vmatpush.bf16.msra.mxu0 %v288
        %318 = vmatpush.bf16.msra.mxu0 %v255
        %319 = vmatmul.bf16.gmra.mxu0 %v281
        %v320 = vpop.f32.mrf.mxu0
        %v321 = vadd.f32 0.0, %v320
        %v322 = vpop.f32.mrf.mxu0
        %v323 = vadd.f32 0.0, %v322
        %324 = vdwg.mxu0
        %325 = vmatpush.bf16.msra.mxu0 0
        %326 = vmatpush.bf16.msra.mxu0 0
        %327 = vmatpush.bf16.msra.mxu0 0
        %328 = vmatpush.bf16.msra.mxu0 0
        %329 = vmatpush.bf16.msra.mxu0 0
        %330 = vmatpush.bf16.msra.mxu0 0
        %331 = vmatpush.bf16.msra.mxu0 %v291
        %332 = vmatpush.bf16.msra.mxu0 %v256
        %333 = vmatmul.bf16.gmra.mxu0 %v281
        %v334 = vpop.f32.mrf.mxu0
        %v335 = vadd.f32 0.0, %v334
        %v336 = vpop.f32.mrf.mxu0
        %v337 = vadd.f32 0.0, %v336
        %338 = vdwg.mxu0
        %339 = vmatpush.bf16.msra.mxu0 0
        %340 = vmatpush.bf16.msra.mxu0 0
        %341 = vmatpush.bf16.msra.mxu0 0
        %342 = vmatpush.bf16.msra.mxu0 0
        %343 = vmatpush.bf16.msra.mxu0 0
        %344 = vmatpush.bf16.msra.mxu0 0
        %345 = vmatpush.bf16.msra.mxu0 %v294
        %346 = vmatpush.bf16.msra.mxu0 %v257
        %347 = vmatmul.bf16.gmra.mxu0 %v281
        %v348 = vpop.f32.mrf.mxu0
        %v349 = vadd.f32 0.0, %v348
        %v350 = vpop.f32.mrf.mxu0
        %v351 = vadd.f32 0.0, %v350
        %352 = vdwg.mxu0
        %353 = vmatpush.bf16.msra.mxu0 0
        %354 = vmatpush.bf16.msra.mxu0 0
        %355 = vmatpush.bf16.msra.mxu0 0
        %356 = vmatpush.bf16.msra.mxu0 0
        %357 = vmatpush.bf16.msra.mxu0 0
        %358 = vmatpush.bf16.msra.mxu0 0
        %359 = vmatpush.bf16.msra.mxu0 %v297
        %360 = vmatpush.bf16.msra.mxu0 %v258
        %361 = vmatmul.bf16.gmra.mxu0 %v281
        %v362 = vpop.f32.mrf.mxu0
        %v363 = vadd.f32 0.0, %v362
        %v364 = vpop.f32.mrf.mxu0
        %v365 = vadd.f32 0.0, %v364
        %366 = vdwg.mxu0
        %367 = vmatpush.bf16.msra.mxu0 0
        %368 = vmatpush.bf16.msra.mxu0 0
        %369 = vmatpush.bf16.msra.mxu0 0
        %370 = vmatpush.bf16.msra.mxu0 0
        %371 = vmatpush.bf16.msra.mxu0 0
        %372 = vmatpush.bf16.msra.mxu0 0
        %373 = vmatpush.bf16.msra.mxu0 %v300
        %374 = vmatpush.bf16.msra.mxu0 %v259
        %375 = vmatmul.bf16.gmra.mxu0 %v281
        %v376 = vpop.f32.mrf.mxu0
        %v377 = vadd.f32 0.0, %v376
        %v378 = vpop.f32.mrf.mxu0
        %v379 = vadd.f32 0.0, %v378
        %380 = vdwg.mxu0
        %381 = vmatpush.bf16.msra.mxu0 0
        %382 = vmatpush.bf16.msra.mxu0 0
        %383 = vmatpush.bf16.msra.mxu0 0
        %384 = vmatpush.bf16.msra.mxu0 0
        %385 = vmatpush.bf16.msra.mxu0 0
        %386 = vmatpush.bf16.msra.mxu0 0
        %387 = vmatpush.bf16.msra.mxu0 %v303
        %388 = vmatpush.bf16.msra.mxu0 %v260
        %389 = vmatmul.bf16.gmra.mxu0 %v281
        %v390 = vpop.f32.mrf.mxu0
        %v391 = vadd.f32 0.0, %v390
        %v392 = vpop.f32.mrf.mxu0
        %v393 = vadd.f32 0.0, %v392
        %394 = vdwg.mxu0
        %395 = vmatpush.bf16.msra.mxu0 0
        %396 = vmatpush.bf16.msra.mxu0 0
        %397 = vmatpush.bf16.msra.mxu0 0
        %398 = vmatpush.bf16.msra.mxu0 0
        %399 = vmatpush.bf16.msra.mxu0 0
        %400 = vmatpush.bf16.msra.mxu0 0
        %401 = vmatpush.bf16.msra.mxu0 %v306
        %402 = vmatpush.bf16.msra.mxu0 %v261
        %403 = vmatmul.bf16.gmra.mxu0 %v281
        %v404 = vpop.f32.mrf.mxu0
        %v405 = vadd.f32 0.0, %v404
        %v406 = vpop.f32.mrf.mxu0
        %v407 = vadd.f32 0.0, %v406
        %408 = vdwg.mxu0
        %409 = vmatpush.bf16.msra.mxu0 0
        %410 = vmatpush.bf16.msra.mxu0 0
        %411 = vmatpush.bf16.msra.mxu0 0
        %412 = vmatpush.bf16.msra.mxu0 0
        %413 = vmatpush.bf16.msra.mxu0 0
        %414 = vmatpush.bf16.msra.mxu0 0
        %415 = vmatpush.bf16.msra.mxu0 %v309
        %416 = vmatpush.bf16.msra.mxu0 %v262
        %417 = vmatmul.bf16.gmra.mxu0 %v281
        %v418 = vpop.f32.mrf.mxu0
        %v419 = vadd.f32 0.0, %v418
        %v420 = vpop.f32.mrf.mxu0
        %v421 = vadd.f32 0.0, %v420
        %422 = vdwg.mxu0
        %v423 = vpack.c.bf16 %v335, %v321
        %v424 = vpack.c.bf16 %v363, %v349
        %v425 = vpack.c.bf16 %v391, %v377
        %v426 = vpack.c.bf16 %v419, %v405
        %v427 = vpack.c.bf16 %v337, %v323
        %v428 = vpack.c.bf16 %v365, %v351
        %v429 = vpack.c.bf16 %v393, %v379
        %v430 = vpack.c.bf16 %v421, %v407
        %431 = vst [vmem:[%s180] sm:$0xff] %v423
        %432 = vst [vmem:[%s180 + $0x8] sm:$0xff] %v424
        %433 = vst [vmem:[%s180 + $0x10] sm:$0xff] %v425
        %434 = vst [vmem:[%s180 + $0x18] sm:$0xff] %v426
        %435 = vst [vmem:[%s180 + $0x20] sm:$0xff] %v427
        %436 = vst [vmem:[%s180 + $0x28] sm:$0xff] %v428
        %437 = vst [vmem:[%s180 + $0x30] sm:$0xff] %v429
        %438 = vst [vmem:[%s180 + $0x38] sm:$0xff] %v430
        %s439 = sand.u32 %s75, 1
        %s440 = scalar_lea.sflag [#allocation4], %s439
        %s441 = sand.u32 %s75, 1
        %s442 = smul.addr %s441, 64
        %s443 = scalar_lea.vmem [#allocation7], %s442
        // Predicated region
        $region37: #{tpu_custom_call.1} parent=27 // pred_check
          %p444 = pneg %p85
        $region38: #{tpu_custom_call.1} parent=27 // pred_check_branch
          %446 = sbr.rel (%p444) target = $region40
        $region39: #{tpu_custom_call.1} parent=27 // pred_region
          %s447 = smul.u32 8, %s20
          %449 = vsyncadd %s440, 0
          %s450 = smul.addr %s447, 4
          %s451 = scalar_lea.hbm %s2, %s450
          %s452 = sshll.u32 %s443, 4
          %s453 = int_to_ptr.vmem [resolvable:$true] %s452
          %s454 = sshll.u32 %s451, 4
          %s455 = int_to_ptr.hbm [resolvable:$true] %s454
          %460 = dma.vmem_to_hbm [thread:$0]  %s453, 1024, %s455, %s440, 512, 1024, 32
        $region40: #{tpu_custom_call.1} parent=27 // pred_fallthru
          _
      $region28: #{tpu_custom_call.1} parent=5 // pred_fallthru
        _
      %p461 = scmp.le.s32.totalorder 2, %s15
      // Predicated region
      $region41: #{tpu_custom_call.1} parent=5 // pred_check
        %p462 = pneg %p461
      $region42: #{tpu_custom_call.1} parent=5 // pred_check_branch
        %464 = sbr.rel (%p462) target = $region44
      $region43: #{tpu_custom_call.1} parent=5 // pred_region
        %s465 = ssub.s32 %s15, 2
        // Predicated region
        $region45: #{tpu_custom_call.1} parent=43 // pred_check
          %p466 = pneg %p91
        $region46: #{tpu_custom_call.1} parent=43 // pred_check_branch
          %468 = sbr.rel (%p466) target = $region48
        $region47: #{tpu_custom_call.1} parent=43 // pred_region
          %s469 = sand.u32 %s76, 1
          %s470 = scalar_lea.sflag [#allocation4], %s469
          %s471 = sand.u32 %s76, 1
          %s472 = smul.addr %s471, 64
          %s473 = scalar_lea.vmem [#allocation7], %s472
          %475 = dma.done %s470, 1024
        $region48: #{tpu_custom_call.1} parent=43 // pred_fallthru
          _
      $region44: #{tpu_custom_call.1} parent=5 // pred_fallthru
        _
    $region6: #{tpu_custom_call.1} parent=1 // loop_footer
      %s19 = sadd.s32 1, %s15
    $region7: #{tpu_custom_call.1} parent=1 // loop_footer_branch
      %14 = sbr.rel target = $region3
    $region8: #{tpu_custom_call.1} parent=1 // loop_exit
      _
    %476 = vsyncpa [#allocation3], 1
    %s477 = scalar_lea.sflag [#allocation3], 1
    %478 = vsyncpa %s477, 1
    %479 = vsyncpa [#allocation6], 1
    %s480 = scalar_lea.sflag [#allocation6], 1
    %481 = vsyncpa %s480, 1
    %482 = vsyncpa [#allocation4], 1
    %s483 = scalar_lea.sflag [#allocation4], 1
    %484 = vsyncpa %s483, 1

</llo_original>
